<compile_context>
chip_gen: v7x
topology: tpu7x:2x2x1
jax: 0.10.0
libtpu: 0.0.40
codegen_flags: <defaults>
</compile_context>

<pallas_src>
import functools

import jax
import jax.numpy as jnp
from jax.experimental import pallas as pl
from jax.experimental.pallas import tpu as pltpu

_LANE = 128
_SUBLANE = 8


def _round_up(x, m):
    return (x + m - 1) // m * m


# -----------------------------------------------------------------------------
# Kernel body: two MXU matmuls + bias + sigmoid, fully fused.  sigmoid lowers
# to exp + reciprocal which land on the EUP slot (free next to VALU/MXU work).
# -----------------------------------------------------------------------------
def _make_mlp_kernel(compute_dtype):
    def _mlp_kernel(x_ref, w1_ref, b1_ref, w2_ref, b2_ref, o_ref):
        x = x_ref[...].astype(compute_dtype)
        w1 = w1_ref[...].astype(compute_dtype)
        h = jnp.dot(x, w1, preferred_element_type=jnp.float32) + b1_ref[...]
        h = jax.nn.sigmoid(h)
        w2 = w2_ref[...].astype(compute_dtype)
        y = jnp.dot(h.astype(compute_dtype), w2,
                    preferred_element_type=jnp.float32) + b2_ref[...]
        o_ref[...] = jax.nn.sigmoid(y).astype(o_ref.dtype)
    return _mlp_kernel


# -----------------------------------------------------------------------------
# One-time weight preparation (hoisted out of the forward path).
# -----------------------------------------------------------------------------
def prepare_predict_params(w1, b1, w2, b2, *, hidden_pad=_LANE, out_pad=_LANE):
    """Pad hnode/onode up to lane multiples once, at weight-prep time.

    Inputs use [in, out] layout: w1 [inode, hnode], w2 [hnode, onode];
    biases may be 1-D or [1, H].

    Padded W1 columns / b1 entries are zero -> padded hidden units are
    sigmoid(0) = 0.5; the matching W2 *rows* are ZERO-padded, so those units
    contribute nothing to the output.  Padded W2 columns / b2 entries are zero
    -> padded output lanes are sigmoid(0) = 0.5 and get sliced off (or kept,
    if the caller wants lane-padded data end-to-end).
    """
    inode, hnode = w1.shape
    hnode2, onode = w2.shape
    assert hnode == hnode2, "w1/w2 hidden dims disagree"
    b1 = jnp.asarray(b1, w1.dtype).reshape(1, hnode)
    b2 = jnp.asarray(b2, w2.dtype).reshape(1, onode)

    hnode_p = _round_up(hnode, hidden_pad)
    onode_p = _round_up(onode, out_pad)

    if hnode_p != hnode:
        w1 = jnp.pad(w1, ((0, 0), (0, hnode_p - hnode)))
        b1 = jnp.pad(b1, ((0, 0), (0, hnode_p - hnode)))
        w2 = jnp.pad(w2, ((0, hnode_p - hnode), (0, 0)))   # MUST be zeros
    if onode_p != onode:
        w2 = jnp.pad(w2, ((0, 0), (0, onode_p - onode)))
        b2 = jnp.pad(b2, ((0, 0), (0, onode_p - onode)))

    return dict(w1=w1, b1=b1, w2=w2, b2=b2,
                inode=inode, hnode=hnode, onode=onode,
                hnode_p=hnode_p, onode_p=onode_p)


# -----------------------------------------------------------------------------
# Sizing / tiling helpers (generation-aware, correctness never depends on them).
# -----------------------------------------------------------------------------
def _vmem_budget_bytes():
    # Stay well under physical VMEM per TensorCore (v7x: 64 MiB; v5e/v6e: 128).
    try:
        cap = int(pltpu.get_tpu_info().vmem_capacity_bytes)
    except Exception:
        cap = 64 * 1024 * 1024
    return min(cap // 2, 48 * 1024 * 1024)


def _detect_num_cores():
    # v7x has 2 TensorCores/chip; v5e/v6e have 1.  Only steers batch splitting.
    try:
        kind = jax.devices()[0].device_kind.lower()
        if "v7" in kind:
            return 2
    except Exception:
        pass
    return 1


def _max_batch_tile(inode, hnode_p, onode_p, vmem_budget):
    # x/out tiles are double-buffered by the pipeline; weights resident
    # (budget 2 copies as the worst case), plus the hidden activation tile.
    weight_bytes = 4 * (inode * hnode_p + hnode_p + hnode_p * onode_p + onode_p)
    per_row = 4 * (2 * inode + 2 * onode_p + hnode_p)
    avail = max(vmem_budget - 2 * weight_bytes, per_row * _SUBLANE)
    tile = avail // per_row
    return max(_SUBLANE, min(tile // _SUBLANE * _SUBLANE, 1024))


def _pick_batch_tile(B, cap, min_tiles):
    """Pick (batch_tile, padded_B).  Prefer a multiple-of-8 tile that divides B
    exactly (no per-call jnp.pad of x); pad only as a last resort."""
    if min_tiles <= 1 and B <= cap:
        return B, B                                   # single grid step, no pad
    upper = min(cap, max(_SUBLANE, B // max(min_tiles, 1)))
    t = max(_SUBLANE, upper // _SUBLANE * _SUBLANE)
    tt = t
    while tt >= _SUBLANE:
        if B % tt == 0:
            return tt, B
        tt -= _SUBLANE
    return t, _round_up(B, t)                         # ragged batch: pad (rare)


# -----------------------------------------------------------------------------
# pallas_call wrapper
# -----------------------------------------------------------------------------
def _pallas_mlp(x, w1, b1, w2, b2, *, batch_tile, grid, compute_dtype,
                vmem_limit, cost, out_dtype, B_p, inode, hnode_p, onode_p,
                single_buffer_weights):
    def _const(i):
        return (0, 0)

    def _weight_spec(shape):
        if single_buffer_weights:
            # Weights never change across grid steps; one VMEM copy is enough
            # (frees headroom for bigger batch tiles, esp. v7x's 64 MiB).
            return pl.BlockSpec(shape, _const, pipeline_mode=pl.Buffered(1))
        return pl.BlockSpec(shape, _const)

    return pl.pallas_call(
        _make_mlp_kernel(compute_dtype),
        out_shape=jax.ShapeDtypeStruct((B_p, onode_p), out_dtype),
        grid_spec=pltpu.PrefetchScalarGridSpec(
            num_scalar_prefetch=0,
            grid=grid,
            in_specs=[
                pl.BlockSpec((batch_tile, inode), lambda i: (i, 0)),  # x tile
                _weight_spec((inode, hnode_p)),                       # W1
                _weight_spec((1, hnode_p)),                           # b1
                _weight_spec((hnode_p, onode_p)),                     # W2
                _weight_spec((1, onode_p)),                           # b2
            ],
            out_specs=pl.BlockSpec((batch_tile, onode_p), lambda i: (i, 0)),
        ),
        compiler_params=pltpu.CompilerParams(
            dimension_semantics=("parallel",),
            vmem_limit_bytes=int(vmem_limit),
        ),
        cost_estimate=cost,
    )(x, w1, b1, w2, b2)


def predict_forward(x, params, *, compute_dtype=jnp.float32,
                    return_padded=False, num_cores=None,
                    single_buffer_weights=True):
    """PREDICT.forward: sigmoid(sigmoid(x @ W1 + b1) @ W2 + b2).

    `params` comes from prepare_predict_params (weights already lane-padded,
    so there is no per-call weight padding on the forward path).
    """
    w1, b1, w2, b2 = params["w1"], params["b1"], params["w2"], params["b2"]
    inode, onode = params["inode"], params["onode"]
    hnode_p, onode_p = params["hnode_p"], params["onode_p"]

    B = x.shape[0]
    assert x.shape[1] == inode

    vmem_budget = _vmem_budget_bytes()
    cap = _max_batch_tile(inode, hnode_p, onode_p, vmem_budget)

    if num_cores is None:
        num_cores = _detect_num_cores()
    # Split the parallel batch axis across TensorCores (v7x) only when each
    # tile's work exceeds the ~0.35 us per-grid-step overhead.
    min_tiles = num_cores if (num_cores > 1 and B >= 256) else 1

    batch_tile, B_p = _pick_batch_tile(B, cap, min_tiles)
    if B_p != B:
        x = jnp.pad(x, ((0, B_p - B), (0, 0)))        # rare ragged-batch path
    grid = (B_p // batch_tile,)

    flops = 2 * B_p * inode * hnode_p + 2 * B_p * hnode_p * onode_p
    transcendentals = B_p * (hnode_p + onode_p)
    bytes_accessed = 4 * (B_p * inode + inode * hnode_p + hnode_p
                          + hnode_p * onode_p + onode_p + B_p * onode_p)
    cost = pl.CostEstimate(flops=flops, transcendentals=transcendentals,
                           bytes_accessed=bytes_accessed)

    call = functools.partial(
        _pallas_mlp, x, w1, b1, w2, b2,
        batch_tile=batch_tile, grid=grid, compute_dtype=compute_dtype,
        vmem_limit=vmem_budget, cost=cost, out_dtype=x.dtype,
        B_p=B_p, inode=inode, hnode_p=hnode_p, onode_p=onode_p)

    if single_buffer_weights:
        try:
            out = call(single_buffer_weights=True)
        except Exception:
            # pl.Buffered(1) not supported by this jax build -> default buffering.
            out = call(single_buffer_weights=False)
    else:
        out = call(single_buffer_weights=False)

    # Skip the trailing slice entirely when nothing was padded (or when the
    # caller wants to stay lane-padded end-to-end).
    if not return_padded and (B_p != B or onode_p != onode):
        out = out[:B, :onode]
    return out


if __name__ == "__main__":
    # config = {'input_node': 32, 'hidden_node': 64, 'output_node': 16}
    B, inode, hnode, onode = 16, 32, 64, 16

    key = jax.random.PRNGKey(0)
    kx, k1, kb1, k2, kb2 = jax.random.split(key, 5)

    x = jax.random.normal(kx, (B, inode), dtype=jnp.float32)

    # Deterministic PyTorch-like init (uniform(-1/sqrt(fan_in), 1/sqrt(fan_in))),
    # weights stored [in, out] (transposed vs nn.Linear.weight).
    lim1 = 1.0 / jnp.sqrt(inode)
    lim2 = 1.0 / jnp.sqrt(hnode)
    w1 = jax.random.uniform(k1, (inode, hnode), jnp.float32, -lim1, lim1)
    b1 = jax.random.uniform(kb1, (hnode,), jnp.float32, -lim1, lim1)
    w2 = jax.random.uniform(k2, (hnode, onode), jnp.float32, -lim2, lim2)
    b2 = jax.random.uniform(kb2, (onode,), jnp.float32, -lim2, lim2)

    # One-time weight preparation (lane padding hoisted out of the forward path).
    params = prepare_predict_params(w1, b1, w2, b2)

    out = predict_forward(x, params)
    out = jax.block_until_ready(out)

    # Pure-JAX reference for correctness.
    ref = jax.nn.sigmoid(jax.nn.sigmoid(x @ w1 + b1[None, :]) @ w2 + b2[None, :])
    assert out.shape == (B, onode)
    assert jnp.allclose(out, ref, atol=1e-5, rtol=1e-5), "mismatch vs reference"

    print("KERNEL_OK")
</pallas_src>

<mosaic_0001>
module attributes {stable_mosaic.version = 11 : i64} {
  func.func @_mlp_kernel(%arg0: i32, %arg1: memref<16x32xf32, #tpu.memory_space<vmem>>, %arg2: memref<32x128xf32, #tpu.memory_space<vmem>>, %arg3: memref<1x128xf32, #tpu.memory_space<vmem>>, %arg4: memref<128x128xf32, #tpu.memory_space<vmem>>, %arg5: memref<1x128xf32, #tpu.memory_space<vmem>>, %arg6: memref<16x128xf32, #tpu.memory_space<vmem>>) attributes {dimension_semantics = [#tpu.dimension_semantics<parallel>], iteration_bounds = array<i64: 1>, scalar_prefetch = 0 : i64, scratch_operands = 0 : i64, tpu.core_type = #tpu.core_type<tc>, window_params = [{transform_indices = @transform_0, window_bounds = array<i64: 16, 32>}, {pipeline_mode = #tpu.pipeline_mode<synchronous>, transform_indices = @transform_1, window_bounds = array<i64: 32, 128>}, {pipeline_mode = #tpu.pipeline_mode<synchronous>, transform_indices = @transform_2, window_bounds = array<i64: 1, 128>}, {pipeline_mode = #tpu.pipeline_mode<synchronous>, transform_indices = @transform_3, window_bounds = array<i64: 128, 128>}, {pipeline_mode = #tpu.pipeline_mode<synchronous>, transform_indices = @transform_4, window_bounds = array<i64: 1, 128>}, {transform_indices = @transform_5, window_bounds = array<i64: 16, 128>}]} {
    %c0 = arith.constant 0 : index
    %c0_0 = arith.constant 0 : index
    %0 = vector.load %arg1[%c0, %c0_0] : memref<16x32xf32, #tpu.memory_space<vmem>>, vector<16x32xf32>
    %c0_1 = arith.constant 0 : index
    %c0_2 = arith.constant 0 : index
    %1 = vector.load %arg2[%c0_1, %c0_2] : memref<32x128xf32, #tpu.memory_space<vmem>>, vector<32x128xf32>
    %cst = arith.constant dense<0.000000e+00> : vector<16x128xf32>
    %2 = tpu.matmul %0, %1, %cst {dimension_numbers = #tpu.dot_dimension_numbers<[1], [0], [0], [1], [0, 0, 1, 1], [], []>} : vector<16x32xf32>, vector<32x128xf32>, vector<16x128xf32> -> vector<16x128xf32>
    %c0_3 = arith.constant 0 : index
    %c0_4 = arith.constant 0 : index
    %3 = vector.load %arg3[%c0_3, %c0_4] : memref<1x128xf32, #tpu.memory_space<vmem>>, vector<1x128xf32>
    %4 = vector.broadcast %3 : vector<1x128xf32> to vector<16x128xf32>
    %5 = arith.addf %2, %4 : vector<16x128xf32>
    %6 = arith.negf %5 : vector<16x128xf32>
    %7 = math.exp %6 : vector<16x128xf32>
    %cst_5 = arith.constant 1.000000e+00 : f32
    %8 = vector.broadcast %cst_5 : f32 to vector<16x128xf32>
    %9 = arith.addf %8, %7 : vector<16x128xf32>
    %10 = arith.divf %8, %9 : vector<16x128xf32>
    %c0_6 = arith.constant 0 : index
    %c0_7 = arith.constant 0 : index
    %11 = vector.load %arg4[%c0_6, %c0_7] : memref<128x128xf32, #tpu.memory_space<vmem>>, vector<128x128xf32>
    %cst_8 = arith.constant dense<0.000000e+00> : vector<16x128xf32>
    %12 = tpu.matmul %10, %11, %cst_8 {dimension_numbers = #tpu.dot_dimension_numbers<[1], [0], [0], [1], [0, 0, 1, 1], [], []>} : vector<16x128xf32>, vector<128x128xf32>, vector<16x128xf32> -> vector<16x128xf32>
    %c0_9 = arith.constant 0 : index
    %c0_10 = arith.constant 0 : index
    %13 = vector.load %arg5[%c0_9, %c0_10] : memref<1x128xf32, #tpu.memory_space<vmem>>, vector<1x128xf32>
    %14 = vector.broadcast %13 : vector<1x128xf32> to vector<16x128xf32>
    %15 = arith.addf %12, %14 : vector<16x128xf32>
    %16 = arith.negf %15 : vector<16x128xf32>
    %17 = math.exp %16 : vector<16x128xf32>
    %cst_11 = arith.constant 1.000000e+00 : f32
    %18 = vector.broadcast %cst_11 : f32 to vector<16x128xf32>
    %19 = arith.addf %18, %17 : vector<16x128xf32>
    %20 = arith.divf %18, %19 : vector<16x128xf32>
    %c0_12 = arith.constant 0 : index
    %c0_13 = arith.constant 0 : index
    %21 = vector.load %arg6[%c0_12, %c0_13] : memref<16x128xf32, #tpu.memory_space<vmem>>, vector<16x128xf32>
    tpu.vector_store %arg6[%c0_12, %c0_13], %20 {strides = array<i32>} : memref<16x128xf32, #tpu.memory_space<vmem>>, vector<16x128xf32>,
    return
  }
  func.func @transform_0(%arg0: i32) -> (i32, i32) {
    %c0_i32 = arith.constant 0 : i32
    %c0_i32_0 = arith.constant 0 : i32
    return %arg0, %c0_i32 : i32, i32
  }
  func.func @transform_1(%arg0: i32) -> (i32, i32) {
    %c0_i32 = arith.constant 0 : i32
    %c0_i32_0 = arith.constant 0 : i32
    %c0_i32_1 = arith.constant 0 : i32
    return %c0_i32, %c0_i32_0 : i32, i32
  }
  func.func @transform_2(%arg0: i32) -> (i32, i32) {
    %c0_i32 = arith.constant 0 : i32
    %c0_i32_0 = arith.constant 0 : i32
    %c0_i32_1 = arith.constant 0 : i32
    return %c0_i32, %c0_i32_0 : i32, i32
  }
  func.func @transform_3(%arg0: i32) -> (i32, i32) {
    %c0_i32 = arith.constant 0 : i32
    %c0_i32_0 = arith.constant 0 : i32
    %c0_i32_1 = arith.constant 0 : i32
    return %c0_i32, %c0_i32_0 : i32, i32
  }
  func.func @transform_4(%arg0: i32) -> (i32, i32) {
    %c0_i32 = arith.constant 0 : i32
    %c0_i32_0 = arith.constant 0 : i32
    %c0_i32_1 = arith.constant 0 : i32
    return %c0_i32, %c0_i32_0 : i32, i32
  }
  func.func @transform_5(%arg0: i32) -> (i32, i32) {
    %c0_i32 = arith.constant 0 : i32
    %c0_i32_0 = arith.constant 0 : i32
    return %arg0, %c0_i32 : i32, i32
  }
}

module attributes {stable_mosaic.version = 11 : i64} {
  func.func @_mlp_kernel(%arg0: i32, %arg1: memref<16x32xf32, #tpu.memory_space<vmem>>, %arg2: memref<32x128xf32, #tpu.memory_space<vmem>>, %arg3: memref<1x128xf32, #tpu.memory_space<vmem>>, %arg4: memref<128x128xf32, #tpu.memory_space<vmem>>, %arg5: memref<1x128xf32, #tpu.memory_space<vmem>>, %arg6: memref<16x128xf32, #tpu.memory_space<vmem>>) attributes {dimension_semantics = [#tpu.dimension_semantics<parallel>], iteration_bounds = array<i64: 1>, scalar_prefetch = 0 : i64, scratch_operands = 0 : i64, tpu.core_type = #tpu.core_type<tc>, window_params = [{transform_indices = @transform_0, window_bounds = array<i64: 16, 32>}, {pipeline_mode = #tpu.pipeline_mode<synchronous>, transform_indices = @transform_1, window_bounds = array<i64: 32, 128>}, {pipeline_mode = #tpu.pipeline_mode<synchronous>, transform_indices = @transform_2, window_bounds = array<i64: 1, 128>}, {pipeline_mode = #tpu.pipeline_mode<synchronous>, transform_indices = @transform_3, window_bounds = array<i64: 128, 128>}, {pipeline_mode = #tpu.pipeline_mode<synchronous>, transform_indices = @transform_4, window_bounds = array<i64: 1, 128>}, {transform_indices = @transform_5, window_bounds = array<i64: 16, 128>}]} {
    %c0 = arith.constant 0 : index
    %c0_0 = arith.constant 0 : index
    %0 = vector.load %arg1[%c0, %c0_0] : memref<16x32xf32, #tpu.memory_space<vmem>>, vector<16x32xf32>
    %c0_1 = arith.constant 0 : index
    %c0_2 = arith.constant 0 : index
    %1 = vector.load %arg2[%c0_1, %c0_2] : memref<32x128xf32, #tpu.memory_space<vmem>>, vector<32x128xf32>
    %cst = arith.constant dense<0.000000e+00> : vector<16x128xf32>
    %2 = tpu.matmul %0, %1, %cst {dimension_numbers = #tpu.dot_dimension_numbers<[1], [0], [0], [1], [0, 0, 1, 1], [], []>} : vector<16x32xf32>, vector<32x128xf32>, vector<16x128xf32> -> vector<16x128xf32>
    %c0_3 = arith.constant 0 : index
    %c0_4 = arith.constant 0 : index
    %3 = vector.load %arg3[%c0_3, %c0_4] : memref<1x128xf32, #tpu.memory_space<vmem>>, vector<1x128xf32>
    %4 = vector.broadcast %3 : vector<1x128xf32> to vector<16x128xf32>
    %5 = arith.addf %2, %4 : vector<16x128xf32>
    %6 = arith.negf %5 : vector<16x128xf32>
    %7 = math.exp %6 : vector<16x128xf32>
    %cst_5 = arith.constant 1.000000e+00 : f32
    %8 = vector.broadcast %cst_5 : f32 to vector<16x128xf32>
    %9 = arith.addf %8, %7 : vector<16x128xf32>
    %10 = arith.divf %8, %9 : vector<16x128xf32>
    %c0_6 = arith.constant 0 : index
    %c0_7 = arith.constant 0 : index
    %11 = vector.load %arg4[%c0_6, %c0_7] : memref<128x128xf32, #tpu.memory_space<vmem>>, vector<128x128xf32>
    %cst_8 = arith.constant dense<0.000000e+00> : vector<16x128xf32>
    %12 = tpu.matmul %10, %11, %cst_8 {dimension_numbers = #tpu.dot_dimension_numbers<[1], [0], [0], [1], [0, 0, 1, 1], [], []>} : vector<16x128xf32>, vector<128x128xf32>, vector<16x128xf32> -> vector<16x128xf32>
    %c0_9 = arith.constant 0 : index
    %c0_10 = arith.constant 0 : index
    %13 = vector.load %arg5[%c0_9, %c0_10] : memref<1x128xf32, #tpu.memory_space<vmem>>, vector<1x128xf32>
    %14 = vector.broadcast %13 : vector<1x128xf32> to vector<16x128xf32>
    %15 = arith.addf %12, %14 : vector<16x128xf32>
    %16 = arith.negf %15 : vector<16x128xf32>
    %17 = math.exp %16 : vector<16x128xf32>
    %cst_11 = arith.constant 1.000000e+00 : f32
    %18 = vector.broadcast %cst_11 : f32 to vector<16x128xf32>
    %19 = arith.addf %18, %17 : vector<16x128xf32>
    %20 = arith.divf %18, %19 : vector<16x128xf32>
    %c0_12 = arith.constant 0 : index
    %c0_13 = arith.constant 0 : index
    %21 = vector.load %arg6[%c0_12, %c0_13] : memref<16x128xf32, #tpu.memory_space<vmem>>, vector<16x128xf32>
    tpu.vector_store %arg6[%c0_12, %c0_13], %20 {strides = array<i32>} : memref<16x128xf32, #tpu.memory_space<vmem>>, vector<16x128xf32>,
    return
  }
  func.func @transform_0(%arg0: i32) -> (i32, i32) {
    %c0_i32 = arith.constant 0 : i32
    %c0_i32_0 = arith.constant 0 : i32
    return %arg0, %c0_i32 : i32, i32
  }
  func.func @transform_1(%arg0: i32) -> (i32, i32) {
    %c0_i32 = arith.constant 0 : i32
    %c0_i32_0 = arith.constant 0 : i32
    %c0_i32_1 = arith.constant 0 : i32
    return %c0_i32, %c0_i32_0 : i32, i32
  }
  func.func @transform_2(%arg0: i32) -> (i32, i32) {
    %c0_i32 = arith.constant 0 : i32
    %c0_i32_0 = arith.constant 0 : i32
    %c0_i32_1 = arith.constant 0 : i32
    return %c0_i32, %c0_i32_0 : i32, i32
  }
  func.func @transform_3(%arg0: i32) -> (i32, i32) {
    %c0_i32 = arith.constant 0 : i32
    %c0_i32_0 = arith.constant 0 : i32
    %c0_i32_1 = arith.constant 0 : i32
    return %c0_i32, %c0_i32_0 : i32, i32
  }
  func.func @transform_4(%arg0: i32) -> (i32, i32) {
    %c0_i32 = arith.constant 0 : i32
    %c0_i32_0 = arith.constant 0 : i32
    %c0_i32_1 = arith.constant 0 : i32
    return %c0_i32, %c0_i32_0 : i32, i32
  }
  func.func @transform_5(%arg0: i32) -> (i32, i32) {
    %c0_i32 = arith.constant 0 : i32
    %c0_i32_0 = arith.constant 0 : i32
    return %arg0, %c0_i32 : i32, i32
  }
}

</mosaic_0001>

<llo_original>
// kernel: tpu_custom_call.1
$region0: #{tpu_custom_call.1}
  #allocation0 [shape = 'u32[]', space=smem, size = 0x4, offset = 0x4, fixed_abs, tag = 'smem constant byte address 0x4 - core index']
  #allocation1 [shape = 'u32[144,128]{1,0:T(1,128)}', space=vmem, size = 0x12000, scoped, tag = 'internal scratch']
  %s0 = inlined_call_operand.hbm [shape: f32[16,32], index: 0, kind: input, shape index: {}]
  %s1 = inlined_call_operand.hbm [shape: f32[32,128], index: 1, kind: input, shape index: {}]
  %s2 = inlined_call_operand.vmem [shape: f32[1,128], index: 2, kind: input, shape index: {}]
  %s3 = inlined_call_operand.hbm [shape: f32[128,128], index: 3, kind: input, shape index: {}]
  %s4 = inlined_call_operand.vmem [shape: f32[1,128], index: 4, kind: input, shape index: {}]
  %s5 = inlined_call_operand.hbm [shape: f32[16,128], index: 5, kind: output, shape index: {}]
  %s6 = sld [smem:[#allocation0]]
  $region42: #{tpu_custom_call.1} parent=0
    _
  %s8 = ssub.s32 1, %s6
  %s9 = scalar_select 0, %s8, %s6
  $region1: #{tpu_custom_call.1} parent=0
    #allocation2 [shape = 'u8[8192]{0}', space=vmem, size = 0x2000, scoped, tag = 'input window, operand 0, single buffered']
    #allocation3 [shape = 's32[1]{0}', space=sflag, size = 0x4, scoped, tag = 'scoped memory for tpu_custom_call.1']
    #allocation4 [shape = 's32[1]{0}', space=sflag, size = 0x4, scoped, tag = 'scoped memory for tpu_custom_call.1']
    #allocation5 [shape = 'u8[16384]{0}', space=vmem, size = 0x4000, scoped, tag = 'input window, operand 1, single buffered']
    #allocation6 [shape = 's32[1]{0}', space=sflag, size = 0x4, scoped, tag = 'scoped memory for tpu_custom_call.1']
    #allocation7 [shape = 'u8[65536]{0}', space=vmem, size = 0x10000, scoped, tag = 'input window, operand 3, single buffered']
    #allocation8 [shape = 'u8[8192]{0}', space=vmem, size = 0x2000, scoped, tag = 'output window, operand 0, single buffered']
    %10 = vsyncpa [#allocation3], 0
    %11 = vsyncpa [#allocation6], 0
    %12 = vsyncpa [#allocation4], 0
    // Predicated region
    $region2: #{tpu_custom_call.1} parent=1 // pred_check
      _
    $region3: #{tpu_custom_call.1} parent=1 // pred_check_branch
      %14 = sbr.rel (0) target = $region5
    $region4: #{tpu_custom_call.1} parent=1 // pred_region
      %s16 = ssub.s32 256, 256
      %17 = vsyncadd [#allocation3], %s16
      %s18 = sshll.u32 [#allocation2], 4
      %s19 = int_to_ptr.vmem [resolvable:$true] %s18
      %24 = dma.hbm_to_vmem [thread:$0]  %s0, 256, %s19, [#allocation3], 128, 128, 8
    $region5: #{tpu_custom_call.1} parent=1 // pred_fallthru
      _
    // Predicated region
    $region6: #{tpu_custom_call.1} parent=1 // pred_check
      _
    $region7: #{tpu_custom_call.1} parent=1 // pred_check_branch
      %26 = sbr.rel (0) target = $region9
    $region8: #{tpu_custom_call.1} parent=1 // pred_region
      %s28 = ssub.s32 512, 512
      %29 = vsyncadd [#allocation6], %s28
      %s30 = sshll.u32 [#allocation5], 4
      %s31 = int_to_ptr.vmem [resolvable:$true] %s30
      %36 = dma.hbm_to_vmem [thread:$0]  %s1, 512, %s31, [#allocation6], 128, 128, 8
    $region9: #{tpu_custom_call.1} parent=1 // pred_fallthru
      _
    // Predicated region
    $region10: #{tpu_custom_call.1} parent=1 // pred_check
      _
    $region11: #{tpu_custom_call.1} parent=1 // pred_check_branch
      %38 = sbr.rel (0) target = $region13
    $region12: #{tpu_custom_call.1} parent=1 // pred_region
      _
    $region13: #{tpu_custom_call.1} parent=1 // pred_fallthru
      _
    // Predicated region
    $region14: #{tpu_custom_call.1} parent=1 // pred_check
      _
    $region15: #{tpu_custom_call.1} parent=1 // pred_check_branch
      %40 = sbr.rel (0) target = $region17
    $region16: #{tpu_custom_call.1} parent=1 // pred_region
      %s42 = ssub.s32 2048, 2048
      %43 = vsyncadd [#allocation6], %s42
      %s44 = sshll.u32 [#allocation7], 4
      %s45 = int_to_ptr.vmem [resolvable:$true] %s44
      %50 = dma.hbm_to_vmem [thread:$0]  %s3, 2048, %s45, [#allocation6], 128, 128, 8
    $region17: #{tpu_custom_call.1} parent=1 // pred_fallthru
      _
    // Predicated region
    $region18: #{tpu_custom_call.1} parent=1 // pred_check
      _
    $region19: #{tpu_custom_call.1} parent=1 // pred_check_branch
      %52 = sbr.rel (0) target = $region21
    $region20: #{tpu_custom_call.1} parent=1 // pred_region
      _
    $region21: #{tpu_custom_call.1} parent=1 // pred_fallthru
      _
    // Predicated region
    $region22: #{tpu_custom_call.1} parent=1 // pred_check
      _
    $region23: #{tpu_custom_call.1} parent=1 // pred_check_branch
      %54 = sbr.rel (0) target = $region25
    $region24: #{tpu_custom_call.1} parent=1 // pred_region
      %55 = dma.done [#allocation3], 256
    $region25: #{tpu_custom_call.1} parent=1 // pred_fallthru
      _
    // Predicated region
    $region26: #{tpu_custom_call.1} parent=1 // pred_check
      _
    $region27: #{tpu_custom_call.1} parent=1 // pred_check_branch
      %57 = sbr.rel (0) target = $region29
    $region28: #{tpu_custom_call.1} parent=1 // pred_region
      %58 = dma.done [#allocation6], 512
    $region29: #{tpu_custom_call.1} parent=1 // pred_fallthru
      _
    // Predicated region
    $region30: #{tpu_custom_call.1} parent=1 // pred_check
      _
    $region31: #{tpu_custom_call.1} parent=1 // pred_check_branch
      %60 = sbr.rel (0) target = $region33
    $region32: #{tpu_custom_call.1} parent=1 // pred_region
      %61 = dma.done [#allocation6], 2048
    $region33: #{tpu_custom_call.1} parent=1 // pred_fallthru
      _
    %v62 = vld [vmem:[#allocation2] sm:$0xff]
    %v63 = vld [vmem:[#allocation2 + $0x8] sm:$0xff]
    %v64 = vld [vmem:[#allocation5] sm:$0xff]
    %v65 = vld [vmem:[#allocation5 + $0x8] sm:$0xff]
    %v66 = vld [vmem:[#allocation5 + $0x10] sm:$0xff]
    %v67 = vld [vmem:[#allocation5 + $0x18] sm:$0xff]
    %v68 = vld [vmem:[%s2] sm:$0x1]
    %v70 = vlaneseq
    %v71 = vshrl.u32 %v70, 7
    %v72 = vsub.s32 0, %v71
    %v73 = vrot.slane %v68, %v72
    %vm75 = vcmask 261120
    %v77 = vsel %vm75, %v62, 0
    %v80 = vsel %vm75, %v63, 0
    %82 = vmatprep.subr.mxu0 0.0
    %83 = vmatpush1.msra.mxu0 %v64
    %84 = vmatprep.subr.mxu0 0.0
    %85 = vmatpush1.msra.mxu0 %v65
    %86 = vmatprep.subr.mxu0 0.0
    %87 = vmatpush1.msra.mxu0 %v66
    %88 = vmatprep.subr.mxu0 0.0
    %89 = vmatpush1.msra.mxu0 %v67
    %90 = vmatprep.subr.mxu0 0.0
    %91 = vmatpush1.msra.mxu0 0.0
    %92 = vmatprep.subr.mxu0 0.0
    %93 = vmatpush1.msra.mxu0 0.0
    %94 = vmatprep.subr.mxu0 0.0
    %95 = vmatpush1.msra.mxu0 0.0
    %96 = vmatprep.subr.mxu0 0.0
    %97 = vmatpush1.msra.mxu0 0.0
    %98 = vmatprep.subr.mxu0 0.0
    %99 = vmatpush1.msra.mxu0 0.0
    %100 = vmatprep.subr.mxu0 0.0
    %101 = vmatpush1.msra.mxu0 0.0
    %102 = vmatprep.subr.mxu0 0.0
    %103 = vmatpush1.msra.mxu0 0.0
    %104 = vmatprep.subr.mxu0 0.0
    %105 = vmatpush1.msra.mxu0 0.0
    %106 = vmatprep.subr.mxu0 0.0
    %107 = vmatpush1.msra.mxu0 0.0
    %108 = vmatprep.subr.mxu0 0.0
    %109 = vmatpush1.msra.mxu0 0.0
    %110 = vmatprep.subr.mxu0 0.0
    %111 = vmatpush1.msra.mxu0 0.0
    %112 = vmatprep.subr.mxu0 0.0
    %113 = vmatpush1.msra.mxu0 0.0
    %114 = vmatprep.subr.mxu0 0.0
    %115 = vmatpush1.msra.mxu0 0.0
    %116 = vmatprep.subr.mxu0 0.0
    %117 = vmatpush1.msra.mxu0 0.0
    %118 = vmatprep.subr.mxu0 0.0
    %119 = vmatpush1.msra.mxu0 0.0
    %120 = vmatprep.subr.mxu0 0.0
    %121 = vmatpush1.msra.mxu0 0.0
    %122 = vmatprep.subr.mxu0 0.0
    %123 = vmatpush1.msra.mxu0 0.0
    %124 = vmatprep.subr.mxu0 0.0
    %125 = vmatpush1.msra.mxu0 0.0
    %126 = vmatprep.subr.mxu0 0.0
    %127 = vmatpush1.msra.mxu0 0.0
    %128 = vmatprep.subr.mxu0 0.0
    %129 = vmatpush1.msra.mxu0 0.0
    %130 = vmatprep.subr.mxu0 0.0
    %131 = vmatpush1.msra.mxu0 0.0
    %132 = vmatprep.subr.mxu0 0.0
    %133 = vmatpush1.msra.mxu0 0.0
    %134 = vmatprep.subr.mxu0 0.0
    %135 = vmatpush1.msra.mxu0 0.0
    %136 = vmatprep.subr.mxu0 0.0
    %137 = vmatpush1.msra.mxu0 0.0
    %138 = vmatprep.subr.mxu0 0.0
    %139 = vmatpush1.msra.mxu0 0.0
    %140 = vmatprep.subr.mxu0 0.0
    %141 = vmatpush1.msra.mxu0 0.0
    %142 = vmatprep.subr.mxu0 0.0
    %143 = vmatpush1.msra.mxu0 0.0
    %144 = vmatprep.subr.mxu0 0.0
    %145 = vmatpush1.msra.mxu0 0.0
    %146 = vmatprep.mubr.f32.mxu0 0.0
    %147 = vmatmul.mubr.f32.gmra.mrb[0].mxu0 %v77
    %v148 = vpop.f32.mrb[0].mxu0
    %v149 = vadd.f32 %v73, %v148
    %v150 = vpop.f32.mrb[0].mxu0
    %151 = vmatprep.mubr.f32.mxu0 0.0
    %152 = vmatmul.mubr.f32.gmra.mrb[0].mxu0 %v80
    %v153 = vpop.f32.mrb[0].mxu0
    %v154 = vadd.f32 %v73, %v153
    %v155 = vpop.f32.mrb[0].mxu0
    %156 = vdwg.mxu0
    %v157 = vxor.u32 %v149, 2147483648
    %v158 = vxor.u32 %v154, 2147483648
    %v159 = vmul.f32 %v157, 1.442695
    %v160 = vpow.pop %v159
    %v161 = vmul.f32 %v158, 1.442695
    %v162 = vpow.pop %v161
    %v163 = vadd.f32 %v160, 1.0
    %v164 = vadd.f32 %v162, 1.0
    %v165 = vrcp.pop %v163
    %v166 = vmul.f32 1.0, %v165
    %v167 = vrcp.pop %v164
    %v168 = vmul.f32 1.0, %v167
    %v169 = vld [vmem:[#allocation7] sm:$0xff]
    %v170 = vld [vmem:[#allocation7 + $0x8] sm:$0xff]
    %v171 = vld [vmem:[#allocation7 + $0x10] sm:$0xff]
    %v172 = vld [vmem:[#allocation7 + $0x18] sm:$0xff]
    %v173 = vld [vmem:[#allocation7 + $0x20] sm:$0xff]
    %v174 = vld [vmem:[#allocation7 + $0x28] sm:$0xff]
    %v175 = vld [vmem:[#allocation7 + $0x30] sm:$0xff]
    %v176 = vld [vmem:[#allocation7 + $0x38] sm:$0xff]
    %v177 = vld [vmem:[#allocation7 + $0x40] sm:$0xff]
    %v178 = vld [vmem:[#allocation7 + $0x48] sm:$0xff]
    %v179 = vld [vmem:[#allocation7 + $0x50] sm:$0xff]
    %v180 = vld [vmem:[#allocation7 + $0x58] sm:$0xff]
    %v181 = vld [vmem:[#allocation7 + $0x60] sm:$0xff]
    %v182 = vld [vmem:[#allocation7 + $0x68] sm:$0xff]
    %v183 = vld [vmem:[#allocation7 + $0x70] sm:$0xff]
    %v184 = vld [vmem:[#allocation7 + $0x78] sm:$0xff]
    %v185 = vld [vmem:[%s4] sm:$0x1]
    %v187 = vlaneseq
    %v188 = vshrl.u32 %v187, 7
    %v189 = vsub.s32 0, %v188
    %v190 = vrot.slane %v185, %v189
    %192 = vmatprep.subr.mxu0 0.0
    %193 = vmatpush1.msra.mxu0 %v169
    %194 = vmatprep.subr.mxu0 0.0
    %195 = vmatpush1.msra.mxu0 %v170
    %196 = vmatprep.subr.mxu0 0.0
    %197 = vmatpush1.msra.mxu0 %v171
    %198 = vmatprep.subr.mxu0 0.0
    %199 = vmatpush1.msra.mxu0 %v172
    %200 = vmatprep.subr.mxu0 0.0
    %201 = vmatpush1.msra.mxu0 %v173
    %202 = vmatprep.subr.mxu0 0.0
    %203 = vmatpush1.msra.mxu0 %v174
    %204 = vmatprep.subr.mxu0 0.0
    %205 = vmatpush1.msra.mxu0 %v175
    %206 = vmatprep.subr.mxu0 0.0
    %207 = vmatpush1.msra.mxu0 %v176
    %208 = vmatprep.subr.mxu0 0.0
    %209 = vmatpush1.msra.mxu0 %v177
    %210 = vmatprep.subr.mxu0 0.0
    %211 = vmatpush1.msra.mxu0 %v178
    %212 = vmatprep.subr.mxu0 0.0
    %213 = vmatpush1.msra.mxu0 %v179
    %214 = vmatprep.subr.mxu0 0.0
    %215 = vmatpush1.msra.mxu0 %v180
    %216 = vmatprep.subr.mxu0 0.0
    %217 = vmatpush1.msra.mxu0 %v181
    %218 = vmatprep.subr.mxu0 0.0
    %219 = vmatpush1.msra.mxu0 %v182
    %220 = vmatprep.subr.mxu0 0.0
    %221 = vmatpush1.msra.mxu0 %v183
    %222 = vmatprep.subr.mxu0 0.0
    %223 = vmatpush1.msra.mxu0 %v184
    %224 = vmatprep.subr.mxu0 0.0
    %225 = vmatpush1.msra.mxu0 0.0
    %226 = vmatprep.subr.mxu0 0.0
    %227 = vmatpush1.msra.mxu0 0.0
    %228 = vmatprep.subr.mxu0 0.0
    %229 = vmatpush1.msra.mxu0 0.0
    %230 = vmatprep.subr.mxu0 0.0
    %231 = vmatpush1.msra.mxu0 0.0
    %232 = vmatprep.subr.mxu0 0.0
    %233 = vmatpush1.msra.mxu0 0.0
    %234 = vmatprep.subr.mxu0 0.0
    %235 = vmatpush1.msra.mxu0 0.0
    %236 = vmatprep.subr.mxu0 0.0
    %237 = vmatpush1.msra.mxu0 0.0
    %238 = vmatprep.subr.mxu0 0.0
    %239 = vmatpush1.msra.mxu0 0.0
    %240 = vmatprep.subr.mxu0 0.0
    %241 = vmatpush1.msra.mxu0 0.0
    %242 = vmatprep.subr.mxu0 0.0
    %243 = vmatpush1.msra.mxu0 0.0
    %244 = vmatprep.subr.mxu0 0.0
    %245 = vmatpush1.msra.mxu0 0.0
    %246 = vmatprep.subr.mxu0 0.0
    %247 = vmatpush1.msra.mxu0 0.0
    %248 = vmatprep.subr.mxu0 0.0
    %249 = vmatpush1.msra.mxu0 0.0
    %250 = vmatprep.subr.mxu0 0.0
    %251 = vmatpush1.msra.mxu0 0.0
    %252 = vmatprep.subr.mxu0 0.0
    %253 = vmatpush1.msra.mxu0 0.0
    %254 = vmatprep.subr.mxu0 0.0
    %255 = vmatpush1.msra.mxu0 0.0
    %256 = vmatprep.mubr.f32.mxu0 0.0
    %257 = vmatmul.mubr.f32.gmra.mrb[0].mxu0 %v166
    %v258 = vpop.f32.mrb[0].mxu0
    %v259 = vadd.f32 %v190, %v258
    %v260 = vpop.f32.mrb[0].mxu0
    %261 = vmatprep.mubr.f32.mxu0 0.0
    %262 = vmatmul.mubr.f32.gmra.mrb[0].mxu0 %v168
    %v263 = vpop.f32.mrb[0].mxu0
    %v264 = vadd.f32 %v190, %v263
    %v265 = vpop.f32.mrb[0].mxu0
    %266 = vdwg.mxu0
    %v267 = vxor.u32 %v259, 2147483648
    %v268 = vxor.u32 %v264, 2147483648
    %v269 = vmul.f32 %v267, 1.442695
    %v270 = vpow.pop %v269
    %v271 = vmul.f32 %v268, 1.442695
    %v272 = vpow.pop %v271
    %v273 = vadd.f32 %v270, 1.0
    %v274 = vadd.f32 %v272, 1.0
    %v275 = vrcp.pop %v273
    %v276 = vmul.f32 1.0, %v275
    %v277 = vrcp.pop %v274
    %v278 = vmul.f32 1.0, %v277
    %279 = vst [vmem:[#allocation8] sm:$0xff] %v276
    %280 = vst [vmem:[#allocation8 + $0x8] sm:$0xff] %v278
    // Predicated region
    $region34: #{tpu_custom_call.1} parent=1 // pred_check
      _
    $region35: #{tpu_custom_call.1} parent=1 // pred_check_branch
      %282 = sbr.rel (0) target = $region37
    $region36: #{tpu_custom_call.1} parent=1 // pred_region
      %s284 = ssub.s32 256, 256
      %285 = vsyncadd [#allocation4], %s284
      %s286 = sshll.u32 [#allocation8], 4
      %s287 = int_to_ptr.vmem [resolvable:$true] %s286
      %292 = dma.vmem_to_hbm [thread:$0]  %s287, 256, %s5, [#allocation4], 128, 128, 8
    $region37: #{tpu_custom_call.1} parent=1 // pred_fallthru
      _
    // Predicated region
    $region38: #{tpu_custom_call.1} parent=1 // pred_check
      _
    $region39: #{tpu_custom_call.1} parent=1 // pred_check_branch
      %294 = sbr.rel (0) target = $region41
    $region40: #{tpu_custom_call.1} parent=1 // pred_region
      %295 = dma.done [#allocation4], 256
    $region41: #{tpu_custom_call.1} parent=1 // pred_fallthru
      _
    %296 = vsyncpa [#allocation3], 1
    %297 = vsyncpa [#allocation6], 1
    %298 = vsyncpa [#allocation4], 1

// kernel: tpu_custom_call.1
$region0: #{tpu_custom_call.1}
  #allocation0 [shape = 'u32[]', space=smem, size = 0x4, offset = 0x4, fixed_abs, tag = 'smem constant byte address 0x4 - core index']
  #allocation1 [shape = 'u32[144,128]{1,0:T(1,128)}', space=vmem, size = 0x12000, scoped, tag = 'internal scratch']
  %s0 = inlined_call_operand.hbm [shape: f32[16,32], index: 0, kind: input, shape index: {}]
  %s1 = inlined_call_operand.hbm [shape: f32[32,128], index: 1, kind: input, shape index: {}]
  %s2 = inlined_call_operand.vmem [shape: f32[1,128], index: 2, kind: input, shape index: {}]
  %s3 = inlined_call_operand.hbm [shape: f32[128,128], index: 3, kind: input, shape index: {}]
  %s4 = inlined_call_operand.vmem [shape: f32[1,128], index: 4, kind: input, shape index: {}]
  %s5 = inlined_call_operand.hbm [shape: f32[16,128], index: 5, kind: output, shape index: {}]
  %s6 = sld [smem:[#allocation0]]
  $region42: #{tpu_custom_call.1} parent=0
    _
  %s8 = ssub.s32 1, %s6
  %s9 = scalar_select 0, %s8, %s6
  $region1: #{tpu_custom_call.1} parent=0
    #allocation2 [shape = 'u8[8192]{0}', space=vmem, size = 0x2000, scoped, tag = 'input window, operand 0, single buffered']
    #allocation3 [shape = 's32[1]{0}', space=sflag, size = 0x4, scoped, tag = 'scoped memory for tpu_custom_call.1']
    #allocation4 [shape = 's32[1]{0}', space=sflag, size = 0x4, scoped, tag = 'scoped memory for tpu_custom_call.1']
    #allocation5 [shape = 'u8[16384]{0}', space=vmem, size = 0x4000, scoped, tag = 'input window, operand 1, single buffered']
    #allocation6 [shape = 's32[1]{0}', space=sflag, size = 0x4, scoped, tag = 'scoped memory for tpu_custom_call.1']
    #allocation7 [shape = 'u8[65536]{0}', space=vmem, size = 0x10000, scoped, tag = 'input window, operand 3, single buffered']
    #allocation8 [shape = 'u8[8192]{0}', space=vmem, size = 0x2000, scoped, tag = 'output window, operand 0, single buffered']
    %10 = vsyncpa [#allocation3], 0
    %11 = vsyncpa [#allocation6], 0
    %12 = vsyncpa [#allocation4], 0
    // Predicated region
    $region2: #{tpu_custom_call.1} parent=1 // pred_check
      _
    $region3: #{tpu_custom_call.1} parent=1 // pred_check_branch
      %14 = sbr.rel (0) target = $region5
    $region4: #{tpu_custom_call.1} parent=1 // pred_region
      %s16 = ssub.s32 256, 256
      %17 = vsyncadd [#allocation3], %s16
      %s18 = sshll.u32 [#allocation2], 4
      %s19 = int_to_ptr.vmem [resolvable:$true] %s18
      %24 = dma.hbm_to_vmem [thread:$0]  %s0, 256, %s19, [#allocation3], 128, 128, 8
    $region5: #{tpu_custom_call.1} parent=1 // pred_fallthru
      _
    // Predicated region
    $region6: #{tpu_custom_call.1} parent=1 // pred_check
      _
    $region7: #{tpu_custom_call.1} parent=1 // pred_check_branch
      %26 = sbr.rel (0) target = $region9
    $region8: #{tpu_custom_call.1} parent=1 // pred_region
      %s28 = ssub.s32 512, 512
      %29 = vsyncadd [#allocation6], %s28
      %s30 = sshll.u32 [#allocation5], 4
      %s31 = int_to_ptr.vmem [resolvable:$true] %s30
      %36 = dma.hbm_to_vmem [thread:$0]  %s1, 512, %s31, [#allocation6], 128, 128, 8
    $region9: #{tpu_custom_call.1} parent=1 // pred_fallthru
      _
    // Predicated region
    $region10: #{tpu_custom_call.1} parent=1 // pred_check
      _
    $region11: #{tpu_custom_call.1} parent=1 // pred_check_branch
      %38 = sbr.rel (0) target = $region13
    $region12: #{tpu_custom_call.1} parent=1 // pred_region
      _
    $region13: #{tpu_custom_call.1} parent=1 // pred_fallthru
      _
    // Predicated region
    $region14: #{tpu_custom_call.1} parent=1 // pred_check
      _
    $region15: #{tpu_custom_call.1} parent=1 // pred_check_branch
      %40 = sbr.rel (0) target = $region17
    $region16: #{tpu_custom_call.1} parent=1 // pred_region
      %s42 = ssub.s32 2048, 2048
      %43 = vsyncadd [#allocation6], %s42
      %s44 = sshll.u32 [#allocation7], 4
      %s45 = int_to_ptr.vmem [resolvable:$true] %s44
      %50 = dma.hbm_to_vmem [thread:$0]  %s3, 2048, %s45, [#allocation6], 128, 128, 8
    $region17: #{tpu_custom_call.1} parent=1 // pred_fallthru
      _
    // Predicated region
    $region18: #{tpu_custom_call.1} parent=1 // pred_check
      _
    $region19: #{tpu_custom_call.1} parent=1 // pred_check_branch
      %52 = sbr.rel (0) target = $region21
    $region20: #{tpu_custom_call.1} parent=1 // pred_region
      _
    $region21: #{tpu_custom_call.1} parent=1 // pred_fallthru
      _
    // Predicated region
    $region22: #{tpu_custom_call.1} parent=1 // pred_check
      _
    $region23: #{tpu_custom_call.1} parent=1 // pred_check_branch
      %54 = sbr.rel (0) target = $region25
    $region24: #{tpu_custom_call.1} parent=1 // pred_region
      %55 = dma.done [#allocation3], 256
    $region25: #{tpu_custom_call.1} parent=1 // pred_fallthru
      _
    // Predicated region
    $region26: #{tpu_custom_call.1} parent=1 // pred_check
      _
    $region27: #{tpu_custom_call.1} parent=1 // pred_check_branch
      %57 = sbr.rel (0) target = $region29
    $region28: #{tpu_custom_call.1} parent=1 // pred_region
      %58 = dma.done [#allocation6], 512
    $region29: #{tpu_custom_call.1} parent=1 // pred_fallthru
      _
    // Predicated region
    $region30: #{tpu_custom_call.1} parent=1 // pred_check
      _
    $region31: #{tpu_custom_call.1} parent=1 // pred_check_branch
      %60 = sbr.rel (0) target = $region33
    $region32: #{tpu_custom_call.1} parent=1 // pred_region
      %61 = dma.done [#allocation6], 2048
    $region33: #{tpu_custom_call.1} parent=1 // pred_fallthru
      _
    %v62 = vld [vmem:[#allocation2] sm:$0xff]
    %v63 = vld [vmem:[#allocation2 + $0x8] sm:$0xff]
    %v64 = vld [vmem:[#allocation5] sm:$0xff]
    %v65 = vld [vmem:[#allocation5 + $0x8] sm:$0xff]
    %v66 = vld [vmem:[#allocation5 + $0x10] sm:$0xff]
    %v67 = vld [vmem:[#allocation5 + $0x18] sm:$0xff]
    %v68 = vld [vmem:[%s2] sm:$0x1]
    %v70 = vlaneseq
    %v71 = vshrl.u32 %v70, 7
    %v72 = vsub.s32 0, %v71
    %v73 = vrot.slane %v68, %v72
    %vm75 = vcmask 261120
    %v77 = vsel %vm75, %v62, 0
    %v80 = vsel %vm75, %v63, 0
    %82 = vmatprep.subr.mxu0 0.0
    %83 = vmatpush1.msra.mxu0 %v64
    %84 = vmatprep.subr.mxu0 0.0
    %85 = vmatpush1.msra.mxu0 %v65
    %86 = vmatprep.subr.mxu0 0.0
    %87 = vmatpush1.msra.mxu0 %v66
    %88 = vmatprep.subr.mxu0 0.0
    %89 = vmatpush1.msra.mxu0 %v67
    %90 = vmatprep.subr.mxu0 0.0
    %91 = vmatpush1.msra.mxu0 0.0
    %92 = vmatprep.subr.mxu0 0.0
    %93 = vmatpush1.msra.mxu0 0.0
    %94 = vmatprep.subr.mxu0 0.0
    %95 = vmatpush1.msra.mxu0 0.0
    %96 = vmatprep.subr.mxu0 0.0
    %97 = vmatpush1.msra.mxu0 0.0
    %98 = vmatprep.subr.mxu0 0.0
    %99 = vmatpush1.msra.mxu0 0.0
    %100 = vmatprep.subr.mxu0 0.0
    %101 = vmatpush1.msra.mxu0 0.0
    %102 = vmatprep.subr.mxu0 0.0
    %103 = vmatpush1.msra.mxu0 0.0
    %104 = vmatprep.subr.mxu0 0.0
    %105 = vmatpush1.msra.mxu0 0.0
    %106 = vmatprep.subr.mxu0 0.0
    %107 = vmatpush1.msra.mxu0 0.0
    %108 = vmatprep.subr.mxu0 0.0
    %109 = vmatpush1.msra.mxu0 0.0
    %110 = vmatprep.subr.mxu0 0.0
    %111 = vmatpush1.msra.mxu0 0.0
    %112 = vmatprep.subr.mxu0 0.0
    %113 = vmatpush1.msra.mxu0 0.0
    %114 = vmatprep.subr.mxu0 0.0
    %115 = vmatpush1.msra.mxu0 0.0
    %116 = vmatprep.subr.mxu0 0.0
    %117 = vmatpush1.msra.mxu0 0.0
    %118 = vmatprep.subr.mxu0 0.0
    %119 = vmatpush1.msra.mxu0 0.0
    %120 = vmatprep.subr.mxu0 0.0
    %121 = vmatpush1.msra.mxu0 0.0
    %122 = vmatprep.subr.mxu0 0.0
    %123 = vmatpush1.msra.mxu0 0.0
    %124 = vmatprep.subr.mxu0 0.0
    %125 = vmatpush1.msra.mxu0 0.0
    %126 = vmatprep.subr.mxu0 0.0
    %127 = vmatpush1.msra.mxu0 0.0
    %128 = vmatprep.subr.mxu0 0.0
    %129 = vmatpush1.msra.mxu0 0.0
    %130 = vmatprep.subr.mxu0 0.0
    %131 = vmatpush1.msra.mxu0 0.0
    %132 = vmatprep.subr.mxu0 0.0
    %133 = vmatpush1.msra.mxu0 0.0
    %134 = vmatprep.subr.mxu0 0.0
    %135 = vmatpush1.msra.mxu0 0.0
    %136 = vmatprep.subr.mxu0 0.0
    %137 = vmatpush1.msra.mxu0 0.0
    %138 = vmatprep.subr.mxu0 0.0
    %139 = vmatpush1.msra.mxu0 0.0
    %140 = vmatprep.subr.mxu0 0.0
    %141 = vmatpush1.msra.mxu0 0.0
    %142 = vmatprep.subr.mxu0 0.0
    %143 = vmatpush1.msra.mxu0 0.0
    %144 = vmatprep.subr.mxu0 0.0
    %145 = vmatpush1.msra.mxu0 0.0
    %146 = vmatprep.mubr.f32.mxu0 0.0
    %147 = vmatmul.mubr.f32.gmra.mrb[0].mxu0 %v77
    %v148 = vpop.f32.mrb[0].mxu0
    %v149 = vadd.f32 %v73, %v148
    %v150 = vpop.f32.mrb[0].mxu0
    %151 = vmatprep.mubr.f32.mxu0 0.0
    %152 = vmatmul.mubr.f32.gmra.mrb[0].mxu0 %v80
    %v153 = vpop.f32.mrb[0].mxu0
    %v154 = vadd.f32 %v73, %v153
    %v155 = vpop.f32.mrb[0].mxu0
    %156 = vdwg.mxu0
    %v157 = vxor.u32 %v149, 2147483648
    %v158 = vxor.u32 %v154, 2147483648
    %v159 = vmul.f32 %v157, 1.442695
    %v160 = vpow.pop %v159
    %v161 = vmul.f32 %v158, 1.442695
    %v162 = vpow.pop %v161
    %v163 = vadd.f32 %v160, 1.0
    %v164 = vadd.f32 %v162, 1.0
    %v165 = vrcp.pop %v163
    %v166 = vmul.f32 1.0, %v165
    %v167 = vrcp.pop %v164
    %v168 = vmul.f32 1.0, %v167
    %v169 = vld [vmem:[#allocation7] sm:$0xff]
    %v170 = vld [vmem:[#allocation7 + $0x8] sm:$0xff]
    %v171 = vld [vmem:[#allocation7 + $0x10] sm:$0xff]
    %v172 = vld [vmem:[#allocation7 + $0x18] sm:$0xff]
    %v173 = vld [vmem:[#allocation7 + $0x20] sm:$0xff]
    %v174 = vld [vmem:[#allocation7 + $0x28] sm:$0xff]
    %v175 = vld [vmem:[#allocation7 + $0x30] sm:$0xff]
    %v176 = vld [vmem:[#allocation7 + $0x38] sm:$0xff]
    %v177 = vld [vmem:[#allocation7 + $0x40] sm:$0xff]
    %v178 = vld [vmem:[#allocation7 + $0x48] sm:$0xff]
    %v179 = vld [vmem:[#allocation7 + $0x50] sm:$0xff]
    %v180 = vld [vmem:[#allocation7 + $0x58] sm:$0xff]
    %v181 = vld [vmem:[#allocation7 + $0x60] sm:$0xff]
    %v182 = vld [vmem:[#allocation7 + $0x68] sm:$0xff]
    %v183 = vld [vmem:[#allocation7 + $0x70] sm:$0xff]
    %v184 = vld [vmem:[#allocation7 + $0x78] sm:$0xff]
    %v185 = vld [vmem:[%s4] sm:$0x1]
    %v187 = vlaneseq
    %v188 = vshrl.u32 %v187, 7
    %v189 = vsub.s32 0, %v188
    %v190 = vrot.slane %v185, %v189
    %192 = vmatprep.subr.mxu0 0.0
    %193 = vmatpush1.msra.mxu0 %v169
    %194 = vmatprep.subr.mxu0 0.0
    %195 = vmatpush1.msra.mxu0 %v170
    %196 = vmatprep.subr.mxu0 0.0
    %197 = vmatpush1.msra.mxu0 %v171
    %198 = vmatprep.subr.mxu0 0.0
    %199 = vmatpush1.msra.mxu0 %v172
    %200 = vmatprep.subr.mxu0 0.0
    %201 = vmatpush1.msra.mxu0 %v173
    %202 = vmatprep.subr.mxu0 0.0
    %203 = vmatpush1.msra.mxu0 %v174
    %204 = vmatprep.subr.mxu0 0.0
    %205 = vmatpush1.msra.mxu0 %v175
    %206 = vmatprep.subr.mxu0 0.0
    %207 = vmatpush1.msra.mxu0 %v176
    %208 = vmatprep.subr.mxu0 0.0
    %209 = vmatpush1.msra.mxu0 %v177
    %210 = vmatprep.subr.mxu0 0.0
    %211 = vmatpush1.msra.mxu0 %v178
    %212 = vmatprep.subr.mxu0 0.0
    %213 = vmatpush1.msra.mxu0 %v179
    %214 = vmatprep.subr.mxu0 0.0
    %215 = vmatpush1.msra.mxu0 %v180
    %216 = vmatprep.subr.mxu0 0.0
    %217 = vmatpush1.msra.mxu0 %v181
    %218 = vmatprep.subr.mxu0 0.0
    %219 = vmatpush1.msra.mxu0 %v182
    %220 = vmatprep.subr.mxu0 0.0
    %221 = vmatpush1.msra.mxu0 %v183
    %222 = vmatprep.subr.mxu0 0.0
    %223 = vmatpush1.msra.mxu0 %v184
    %224 = vmatprep.subr.mxu0 0.0
    %225 = vmatpush1.msra.mxu0 0.0
    %226 = vmatprep.subr.mxu0 0.0
    %227 = vmatpush1.msra.mxu0 0.0
    %228 = vmatprep.subr.mxu0 0.0
    %229 = vmatpush1.msra.mxu0 0.0
    %230 = vmatprep.subr.mxu0 0.0
    %231 = vmatpush1.msra.mxu0 0.0
    %232 = vmatprep.subr.mxu0 0.0
    %233 = vmatpush1.msra.mxu0 0.0
    %234 = vmatprep.subr.mxu0 0.0
    %235 = vmatpush1.msra.mxu0 0.0
    %236 = vmatprep.subr.mxu0 0.0
    %237 = vmatpush1.msra.mxu0 0.0
    %238 = vmatprep.subr.mxu0 0.0
    %239 = vmatpush1.msra.mxu0 0.0
    %240 = vmatprep.subr.mxu0 0.0
    %241 = vmatpush1.msra.mxu0 0.0
    %242 = vmatprep.subr.mxu0 0.0
    %243 = vmatpush1.msra.mxu0 0.0
    %244 = vmatprep.subr.mxu0 0.0
    %245 = vmatpush1.msra.mxu0 0.0
    %246 = vmatprep.subr.mxu0 0.0
    %247 = vmatpush1.msra.mxu0 0.0
    %248 = vmatprep.subr.mxu0 0.0
    %249 = vmatpush1.msra.mxu0 0.0
    %250 = vmatprep.subr.mxu0 0.0
    %251 = vmatpush1.msra.mxu0 0.0
    %252 = vmatprep.subr.mxu0 0.0
    %253 = vmatpush1.msra.mxu0 0.0
    %254 = vmatprep.subr.mxu0 0.0
    %255 = vmatpush1.msra.mxu0 0.0
    %256 = vmatprep.mubr.f32.mxu0 0.0
    %257 = vmatmul.mubr.f32.gmra.mrb[0].mxu0 %v166
    %v258 = vpop.f32.mrb[0].mxu0
    %v259 = vadd.f32 %v190, %v258
    %v260 = vpop.f32.mrb[0].mxu0
    %261 = vmatprep.mubr.f32.mxu0 0.0
    %262 = vmatmul.mubr.f32.gmra.mrb[0].mxu0 %v168
    %v263 = vpop.f32.mrb[0].mxu0
    %v264 = vadd.f32 %v190, %v263
    %v265 = vpop.f32.mrb[0].mxu0
    %266 = vdwg.mxu0
    %v267 = vxor.u32 %v259, 2147483648
    %v268 = vxor.u32 %v264, 2147483648
    %v269 = vmul.f32 %v267, 1.442695
    %v270 = vpow.pop %v269
    %v271 = vmul.f32 %v268, 1.442695
    %v272 = vpow.pop %v271
    %v273 = vadd.f32 %v270, 1.0
    %v274 = vadd.f32 %v272, 1.0
    %v275 = vrcp.pop %v273
    %v276 = vmul.f32 1.0, %v275
    %v277 = vrcp.pop %v274
    %v278 = vmul.f32 1.0, %v277
    %279 = vst [vmem:[#allocation8] sm:$0xff] %v276
    %280 = vst [vmem:[#allocation8 + $0x8] sm:$0xff] %v278
    // Predicated region
    $region34: #{tpu_custom_call.1} parent=1 // pred_check
      _
    $region35: #{tpu_custom_call.1} parent=1 // pred_check_branch
      %282 = sbr.rel (0) target = $region37
    $region36: #{tpu_custom_call.1} parent=1 // pred_region
      %s284 = ssub.s32 256, 256
      %285 = vsyncadd [#allocation4], %s284
      %s286 = sshll.u32 [#allocation8], 4
      %s287 = int_to_ptr.vmem [resolvable:$true] %s286
      %292 = dma.vmem_to_hbm [thread:$0]  %s287, 256, %s5, [#allocation4], 128, 128, 8
    $region37: #{tpu_custom_call.1} parent=1 // pred_fallthru
      _
    // Predicated region
    $region38: #{tpu_custom_call.1} parent=1 // pred_check
      _
    $region39: #{tpu_custom_call.1} parent=1 // pred_check_branch
      %294 = sbr.rel (0) target = $region41
    $region40: #{tpu_custom_call.1} parent=1 // pred_region
      %295 = dma.done [#allocation4], 256
    $region41: #{tpu_custom_call.1} parent=1 // pred_fallthru
      _
    %296 = vsyncpa [#allocation3], 1
    %297 = vsyncpa [#allocation6], 1
    %298 = vsyncpa [#allocation4], 1

</llo_original>
